<compile_context>
chip_gen: v6e
topology: v6e:2x2x1
jax: 0.10.0
libtpu: 0.0.40
codegen_flags: <defaults>
</compile_context>

<pallas_src>
import functools

import jax
import jax.numpy as jnp
from jax.experimental import pallas as pl
from jax.experimental.pallas import tpu as pltpu


def _round_up(x, m):
    return ((x + m - 1) // m) * m


def _decoder_kernel(x_ref, r_ref, w1x_ref, w1r_ref, b1_ref, w2_ref, b2_ref,
                    w3_ref, b3_ref, out_ref, *, out_dim):
    # Layer 1 with the concat fused into two matmuls (f32 accumulation).
    h1 = (jnp.dot(x_ref[...], w1x_ref[...], preferred_element_type=jnp.float32)
          + jnp.dot(r_ref[...], w1r_ref[...], preferred_element_type=jnp.float32)
          + b1_ref[...])
    h1 = jnp.maximum(h1, 0.0)

    # Layer 2: Linear + ReLU.
    h2 = jnp.dot(h1.astype(w2_ref.dtype), w2_ref[...],
                 preferred_element_type=jnp.float32) + b2_ref[...]
    h2 = jnp.maximum(h2, 0.0)

    # Layer 3 -> combined [TILE_M, 2*out_dim] = [mean | raw_sigma].
    out = jnp.dot(h2.astype(w3_ref.dtype), w3_ref[...],
                  preferred_element_type=jnp.float32) + b3_ref[...]

    # Numerically-stable softplus on all lanes (EUP is a free slot), then a
    # per-lane select keeps the mean half linear -- no non-128-aligned slices
    # and a single full-tile store.
    sp = jnp.maximum(out, 0.0) + jnp.log1p(jnp.exp(-jnp.abs(out)))
    lane = jax.lax.broadcasted_iota(jnp.int32, out.shape, dimension=1)
    out_ref[...] = jnp.where(lane < out_dim, out, sp).astype(out_ref.dtype)


def _pick_tile(M, in_dim, lat_dim, out2, compute_dtype,
               tile_m, vmem_budget_bytes=24 * 1024 * 1024):
    """Largest multiple-of-8 row tile <= tile_m that fits a VMEM budget.

    VMEM lane dims pad to 128, so budget with padded lane widths; inputs and
    the output are double-buffered, plus f32 intermediates h1/h2/out.
    """
    itemsize = jnp.dtype(compute_dtype).itemsize
    per_row = (2 * (128 * itemsize)            # x tile, double-buffered (lane-padded)
               + 2 * (128 * itemsize)          # r tile
               + 2 * (128 * 4)                 # out tile (f32)
               + 3 * (128 * 4))                # h1, h2, out intermediates (f32)
    tile = max(8, min(tile_m, vmem_budget_bytes // per_row))
    tile = (tile // 8) * 8
    return min(tile, _round_up(M, 8))


def deterministic_decoder_forward(x, r, params, *, tile_m=1024,
                                  compute_dtype=jnp.bfloat16):
    """x: (B, T, input_dim), r: (B, T, latent_dim) -> (mean, sigma), each (B, T, output_dim)."""
    w1, b1, w2, b2, w3, b3 = params
    B, T, input_dim = x.shape
    latent_dim = r.shape[-1]
    hidden = w1.shape[1]
    out2 = w3.shape[1]
    out_dim = out2 // 2
    M = B * T

    # Tile the row axis; pad M to a tile multiple (tile is a multiple of 8).
    tile = _pick_tile(M, input_dim, latent_dim, out2, compute_dtype, tile_m)
    m_pad = _round_up(M, tile)
    grid = (m_pad // tile,)

    x2 = x.reshape(M, input_dim)
    r2 = r.reshape(M, latent_dim)
    if m_pad != M:
        x2 = jnp.pad(x2, ((0, m_pad - M), (0, 0)))
        r2 = jnp.pad(r2, ((0, m_pad - M), (0, 0)))

    cd = compute_dtype
    x2 = x2.astype(cd)
    r2 = r2.astype(cd)
    # Static split of w1 (free) fuses the concat; weights go to the MXU dtype.
    w1x = w1[:input_dim].astype(cd)
    w1r = w1[input_dim:].astype(cd)
    w2c = w2.astype(cd)
    w3c = w3.astype(cd)
    b1r = b1.reshape(1, -1).astype(jnp.float32)
    b2r = b2.reshape(1, -1).astype(jnp.float32)
    b3r = b3.reshape(1, -1).astype(jnp.float32)

    def rows(i):
        return (i, 0)

    def whole(i):
        return (0, 0)

    itemsize = jnp.dtype(cd).itemsize
    bytes_accessed = (
        (x2.size + r2.size + w1x.size + w1r.size + w2c.size + w3c.size) * itemsize
        + (b1r.size + b2r.size + b3r.size) * 4
        + m_pad * out2 * 4)
    cost = pl.CostEstimate(
        flops=2 * m_pad * (input_dim * hidden + latent_dim * hidden
                           + hidden * hidden + hidden * out2),
        transcendentals=2 * m_pad * out2,
        bytes_accessed=bytes_accessed,
    )

    out = pl.pallas_call(
        functools.partial(_decoder_kernel, out_dim=out_dim),
        out_shape=jax.ShapeDtypeStruct((m_pad, out2), jnp.float32),
        grid_spec=pltpu.PrefetchScalarGridSpec(
            num_scalar_prefetch=0,
            grid=grid,
            in_specs=[
                pl.BlockSpec((tile, input_dim), rows),      # x rows
                pl.BlockSpec((tile, latent_dim), rows),     # r rows
                pl.BlockSpec((input_dim, hidden), whole),   # w1_x (VMEM-resident)
                pl.BlockSpec((latent_dim, hidden), whole),  # w1_r
                pl.BlockSpec((1, hidden), whole),           # b1
                pl.BlockSpec((hidden, hidden), whole),      # w2
                pl.BlockSpec((1, hidden), whole),           # b2
                pl.BlockSpec((hidden, out2), whole),        # w3
                pl.BlockSpec((1, out2), whole),             # b3
            ],
            out_specs=pl.BlockSpec((tile, out2), rows),
        ),
        compiler_params=pltpu.CompilerParams(
            dimension_semantics=("parallel",),
            vmem_limit_bytes=48 * 1024 * 1024,
        ),
        cost_estimate=cost,
    )(x2, r2, w1x, w1r, b1r, w2c, b2r, w3c, b3r)

    out = out[:M]
    mean = out[:, :out_dim].reshape(B, T, out_dim)
    sigma = out[:, out_dim:].reshape(B, T, out_dim)
    return mean, sigma


def init_decoder_params(key, input_dim, latent_dim, output_dim, include_latent=False):
    """Deterministic synthetic init mirroring the module's layer shapes."""
    input_latent = 2 * latent_dim if include_latent else latent_dim
    d_in = input_latent + input_dim
    k1, k2, k3 = jax.random.split(key, 3)

    def _layer(k, fan_in, fan_out):
        w = jax.random.normal(k, (fan_in, fan_out), jnp.float32) / jnp.sqrt(fan_in)
        b = jnp.zeros((fan_out,), jnp.float32)
        return w, b

    w1, b1 = _layer(k1, d_in, latent_dim)
    w2, b2 = _layer(k2, latent_dim, latent_dim)
    w3, b3 = _layer(k3, latent_dim, 2 * output_dim)
    return (w1, b1, w2, b2, w3, b3)


def _reference(x, r, params):
    w1, b1, w2, b2, w3, b3 = params
    z = jnp.concatenate([x, r], axis=-1)
    h = jax.nn.relu(z @ w1 + b1)
    h = jax.nn.relu(h @ w2 + b2)
    out = h @ w3 + b3
    o = w3.shape[1] // 2
    return out[..., :o], jax.nn.softplus(out[..., o:])


if __name__ == "__main__":
    batch, num_targets = 2, 8
    input_dim, latent_dim, output_dim = 4, 32, 4

    key = jax.random.PRNGKey(0)
    kx, kr, kp = jax.random.split(key, 3)
    x = jax.random.normal(kx, (batch, num_targets, input_dim), jnp.float32)
    r = jax.random.normal(kr, (batch, num_targets, latent_dim), jnp.float32)
    params = init_decoder_params(kp, input_dim, latent_dim, output_dim)

    ref_mean, ref_sigma = _reference(x, r, params)

    # Optimized bf16 path (default) -- loose tolerance vs the f32 reference.
    mean, sigma = deterministic_decoder_forward(x, r, params)
    jax.block_until_ready((mean, sigma))
    assert mean.shape == (batch, num_targets, output_dim)
    assert sigma.shape == (batch, num_targets, output_dim)
    assert jnp.allclose(mean, ref_mean, atol=5e-2, rtol=5e-2)
    assert jnp.allclose(sigma, ref_sigma, atol=5e-2, rtol=5e-2)

    # Full-f32 path for a tight numerical check of the kernel math.
    mean32, sigma32 = deterministic_decoder_forward(
        x, r, params, compute_dtype=jnp.float32)
    jax.block_until_ready((mean32, sigma32))
    assert jnp.allclose(mean32, ref_mean, atol=1e-4, rtol=1e-4)
    assert jnp.allclose(sigma32, ref_sigma, atol=1e-4, rtol=1e-4)

    # Exercise the multi-step grid + row-padding path (M not a tile multiple).
    Tb = 1300  # M = 2600 -> tile 1024, padded to 3072, grid = (3,)
    xb = jax.random.normal(kx, (batch, Tb, input_dim), jnp.float32)
    rb = jax.random.normal(kr, (batch, Tb, latent_dim), jnp.float32)
    mb, sb = deterministic_decoder_forward(xb, rb, params)
    jax.block_until_ready((mb, sb))
    rmb, rsb = _reference(xb, rb, params)
    assert mb.shape == (batch, Tb, output_dim) and sb.shape == (batch, Tb, output_dim)
    assert jnp.allclose(mb, rmb, atol=5e-2, rtol=5e-2)
    assert jnp.allclose(sb, rsb, atol=5e-2, rtol=5e-2)

    print("KERNEL_OK")
</pallas_src>

<mosaic_0001>
module attributes {stable_mosaic.version = 11 : i64} {
  func.func @_decoder_kernel(%arg0: i32, %arg1: memref<16x4xbf16, #tpu.memory_space<vmem>>, %arg2: memref<16x32xbf16, #tpu.memory_space<vmem>>, %arg3: memref<4x32xbf16, #tpu.memory_space<vmem>>, %arg4: memref<32x32xbf16, #tpu.memory_space<vmem>>, %arg5: memref<1x32xf32, #tpu.memory_space<vmem>>, %arg6: memref<32x32xbf16, #tpu.memory_space<vmem>>, %arg7: memref<1x32xf32, #tpu.memory_space<vmem>>, %arg8: memref<32x8xbf16, #tpu.memory_space<vmem>>, %arg9: memref<1x8xf32, #tpu.memory_space<vmem>>, %arg10: memref<16x8xf32, #tpu.memory_space<vmem>>) attributes {dimension_semantics = [#tpu.dimension_semantics<parallel>], iteration_bounds = array<i64: 1>, scalar_prefetch = 0 : i64, scratch_operands = 0 : i64, tpu.core_type = #tpu.core_type<tc>, window_params = [{transform_indices = @transform_0, window_bounds = array<i64: 16, 4>}, {transform_indices = @transform_1, window_bounds = array<i64: 16, 32>}, {pipeline_mode = #tpu.pipeline_mode<synchronous>, transform_indices = @transform_2, window_bounds = array<i64: 4, 32>}, {pipeline_mode = #tpu.pipeline_mode<synchronous>, transform_indices = @transform_3, window_bounds = array<i64: 32, 32>}, {pipeline_mode = #tpu.pipeline_mode<synchronous>, transform_indices = @transform_4, window_bounds = array<i64: 1, 32>}, {pipeline_mode = #tpu.pipeline_mode<synchronous>, transform_indices = @transform_5, window_bounds = array<i64: 32, 32>}, {pipeline_mode = #tpu.pipeline_mode<synchronous>, transform_indices = @transform_6, window_bounds = array<i64: 1, 32>}, {pipeline_mode = #tpu.pipeline_mode<synchronous>, transform_indices = @transform_7, window_bounds = array<i64: 32, 8>}, {pipeline_mode = #tpu.pipeline_mode<synchronous>, transform_indices = @transform_8, window_bounds = array<i64: 1, 8>}, {transform_indices = @transform_9, window_bounds = array<i64: 16, 8>}]} {
    %c0 = arith.constant 0 : index
    %c0_0 = arith.constant 0 : index
    %0 = vector.load %arg1[%c0, %c0_0] : memref<16x4xbf16, #tpu.memory_space<vmem>>, vector<16x4xbf16>
    %c0_1 = arith.constant 0 : index
    %c0_2 = arith.constant 0 : index
    %1 = vector.load %arg3[%c0_1, %c0_2] : memref<4x32xbf16, #tpu.memory_space<vmem>>, vector<4x32xbf16>
    %cst = arith.constant dense<0.000000e+00> : vector<16x32xf32>
    %2 = tpu.matmul %0, %1, %cst {dimension_numbers = #tpu.dot_dimension_numbers<[1], [0], [0], [1], [0, 0, 1, 1], [], []>} : vector<16x4xbf16>, vector<4x32xbf16>, vector<16x32xf32> -> vector<16x32xf32>
    %c0_3 = arith.constant 0 : index
    %c0_4 = arith.constant 0 : index
    %3 = vector.load %arg2[%c0_3, %c0_4] : memref<16x32xbf16, #tpu.memory_space<vmem>>, vector<16x32xbf16>
    %c0_5 = arith.constant 0 : index
    %c0_6 = arith.constant 0 : index
    %4 = vector.load %arg4[%c0_5, %c0_6] : memref<32x32xbf16, #tpu.memory_space<vmem>>, vector<32x32xbf16>
    %cst_7 = arith.constant dense<0.000000e+00> : vector<16x32xf32>
    %5 = tpu.matmul %3, %4, %cst_7 {dimension_numbers = #tpu.dot_dimension_numbers<[1], [0], [0], [1], [0, 0, 1, 1], [], []>} : vector<16x32xbf16>, vector<32x32xbf16>, vector<16x32xf32> -> vector<16x32xf32>
    %6 = arith.addf %2, %5 : vector<16x32xf32>
    %c0_8 = arith.constant 0 : index
    %c0_9 = arith.constant 0 : index
    %7 = vector.load %arg5[%c0_8, %c0_9] : memref<1x32xf32, #tpu.memory_space<vmem>>, vector<1x32xf32>
    %8 = vector.broadcast %7 : vector<1x32xf32> to vector<16x32xf32>
    %9 = arith.addf %6, %8 : vector<16x32xf32>
    %cst_10 = arith.constant 0.000000e+00 : f32
    %10 = vector.broadcast %cst_10 : f32 to vector<16x32xf32>
    %11 = arith.maximumf %9, %10 : vector<16x32xf32>
    %12 = arith.truncf %11 : vector<16x32xf32> to vector<16x32xbf16>
    %c0_11 = arith.constant 0 : index
    %c0_12 = arith.constant 0 : index
    %13 = vector.load %arg6[%c0_11, %c0_12] : memref<32x32xbf16, #tpu.memory_space<vmem>>, vector<32x32xbf16>
    %cst_13 = arith.constant dense<0.000000e+00> : vector<16x32xf32>
    %14 = tpu.matmul %12, %13, %cst_13 {dimension_numbers = #tpu.dot_dimension_numbers<[1], [0], [0], [1], [0, 0, 1, 1], [], []>} : vector<16x32xbf16>, vector<32x32xbf16>, vector<16x32xf32> -> vector<16x32xf32>
    %c0_14 = arith.constant 0 : index
    %c0_15 = arith.constant 0 : index
    %15 = vector.load %arg7[%c0_14, %c0_15] : memref<1x32xf32, #tpu.memory_space<vmem>>, vector<1x32xf32>
    %16 = vector.broadcast %15 : vector<1x32xf32> to vector<16x32xf32>
    %17 = arith.addf %14, %16 : vector<16x32xf32>
    %cst_16 = arith.constant 0.000000e+00 : f32
    %18 = vector.broadcast %cst_16 : f32 to vector<16x32xf32>
    %19 = arith.maximumf %17, %18 : vector<16x32xf32>
    %20 = arith.truncf %19 : vector<16x32xf32> to vector<16x32xbf16>
    %c0_17 = arith.constant 0 : index
    %c0_18 = arith.constant 0 : index
    %21 = vector.load %arg8[%c0_17, %c0_18] : memref<32x8xbf16, #tpu.memory_space<vmem>>, vector<32x8xbf16>
    %cst_19 = arith.constant dense<0.000000e+00> : vector<16x8xf32>
    %22 = tpu.matmul %20, %21, %cst_19 {dimension_numbers = #tpu.dot_dimension_numbers<[1], [0], [0], [1], [0, 0, 1, 1], [], []>} : vector<16x32xbf16>, vector<32x8xbf16>, vector<16x8xf32> -> vector<16x8xf32>
    %c0_20 = arith.constant 0 : index
    %c0_21 = arith.constant 0 : index
    %23 = vector.load %arg9[%c0_20, %c0_21] : memref<1x8xf32, #tpu.memory_space<vmem>>, vector<1x8xf32>
    %24 = vector.broadcast %23 : vector<1x8xf32> to vector<16x8xf32>
    %25 = arith.addf %22, %24 : vector<16x8xf32>
    %cst_22 = arith.constant 0.000000e+00 : f32
    %26 = vector.broadcast %cst_22 : f32 to vector<16x8xf32>
    %27 = arith.maximumf %25, %26 : vector<16x8xf32>
    %28 = math.absf %25 : vector<16x8xf32>
    %cst_23 = arith.constant 0.000000e+00 : f32
    %29 = vector.broadcast %cst_23 : f32 to vector<16x8xf32>
    %30 = arith.subf %29, %28 : vector<16x8xf32>
    %31 = math.exp %30 : vector<16x8xf32>
    %32 = math.log1p %31 : vector<16x8xf32>
    %33 = arith.addf %27, %32 : vector<16x8xf32>
    %34 = tpu.iota {dimensions = array<i32: 1>} : vector<16x8xi32>
    %c4_i32 = arith.constant 4 : i32
    %35 = vector.broadcast %c4_i32 : i32 to vector<16x8xi32>
    %36 = arith.cmpi slt, %34, %35 : vector<16x8xi32>
    %37 = arith.select %36, %25, %33 : vector<16x8xi1>, vector<16x8xf32>
    %c0_24 = arith.constant 0 : index
    %c0_25 = arith.constant 0 : index
    %38 = vector.load %arg10[%c0_24, %c0_25] : memref<16x8xf32, #tpu.memory_space<vmem>>, vector<16x8xf32>
    tpu.vector_store %arg10[%c0_24, %c0_25], %37 {strides = array<i32>} : memref<16x8xf32, #tpu.memory_space<vmem>>, vector<16x8xf32>,
    return
  }
  func.func @transform_0(%arg0: i32) -> (i32, i32) {
    %c0_i32 = arith.constant 0 : i32
    %c0_i32_0 = arith.constant 0 : i32
    return %arg0, %c0_i32 : i32, i32
  }
  func.func @transform_1(%arg0: i32) -> (i32, i32) {
    %c0_i32 = arith.constant 0 : i32
    %c0_i32_0 = arith.constant 0 : i32
    return %arg0, %c0_i32 : i32, i32
  }
  func.func @transform_2(%arg0: i32) -> (i32, i32) {
    %c0_i32 = arith.constant 0 : i32
    %c0_i32_0 = arith.constant 0 : i32
    %c0_i32_1 = arith.constant 0 : i32
    return %c0_i32, %c0_i32_0 : i32, i32
  }
  func.func @transform_3(%arg0: i32) -> (i32, i32) {
    %c0_i32 = arith.constant 0 : i32
    %c0_i32_0 = arith.constant 0 : i32
    %c0_i32_1 = arith.constant 0 : i32
    return %c0_i32, %c0_i32_0 : i32, i32
  }
  func.func @transform_4(%arg0: i32) -> (i32, i32) {
    %c0_i32 = arith.constant 0 : i32
    %c0_i32_0 = arith.constant 0 : i32
    %c0_i32_1 = arith.constant 0 : i32
    return %c0_i32, %c0_i32_0 : i32, i32
  }
  func.func @transform_5(%arg0: i32) -> (i32, i32) {
    %c0_i32 = arith.constant 0 : i32
    %c0_i32_0 = arith.constant 0 : i32
    %c0_i32_1 = arith.constant 0 : i32
    return %c0_i32, %c0_i32_0 : i32, i32
  }
  func.func @transform_6(%arg0: i32) -> (i32, i32) {
    %c0_i32 = arith.constant 0 : i32
    %c0_i32_0 = arith.constant 0 : i32
    %c0_i32_1 = arith.constant 0 : i32
    return %c0_i32, %c0_i32_0 : i32, i32
  }
  func.func @transform_7(%arg0: i32) -> (i32, i32) {
    %c0_i32 = arith.constant 0 : i32
    %c0_i32_0 = arith.constant 0 : i32
    %c0_i32_1 = arith.constant 0 : i32
    return %c0_i32, %c0_i32_0 : i32, i32
  }
  func.func @transform_8(%arg0: i32) -> (i32, i32) {
    %c0_i32 = arith.constant 0 : i32
    %c0_i32_0 = arith.constant 0 : i32
    %c0_i32_1 = arith.constant 0 : i32
    return %c0_i32, %c0_i32_0 : i32, i32
  }
  func.func @transform_9(%arg0: i32) -> (i32, i32) {
    %c0_i32 = arith.constant 0 : i32
    %c0_i32_0 = arith.constant 0 : i32
    return %arg0, %c0_i32 : i32, i32
  }
}

</mosaic_0001>

<llo_original>
// kernel: tpu_custom_call.1
$region0: #{tpu_custom_call.1}
  #allocation0 [shape = 'u32[]', space=smem, size = 0x4, offset = 0x4, fixed_abs, tag = 'smem constant byte address 0x4 - core index']
  #allocation1 [shape = 'u32[144,128]{1,0:T(1,128)}', space=vmem, size = 0x12000, scoped, tag = 'internal scratch']
  %s0 = inlined_call_operand.vmem [shape: bf16[16,4], index: 0, kind: input, shape index: {}]
  %s1 = inlined_call_operand.hbm [shape: bf16[16,32], index: 1, kind: input, shape index: {}]
  %s2 = inlined_call_operand.hbm [shape: bf16[4,32], index: 2, kind: input, shape index: {}]
  %s3 = inlined_call_operand.vmem [shape: bf16[32,32], index: 3, kind: input, shape index: {}]
  %s4 = inlined_call_operand.vmem [shape: f32[1,32], index: 4, kind: input, shape index: {}]
  %s5 = inlined_call_operand.vmem [shape: bf16[32,32], index: 5, kind: input, shape index: {}]
  %s6 = inlined_call_operand.vmem [shape: f32[1,32], index: 6, kind: input, shape index: {}]
  %s7 = inlined_call_operand.vmem [shape: bf16[32,8], index: 7, kind: input, shape index: {}]
  %s8 = inlined_call_operand.vmem [shape: f32[1,8], index: 8, kind: input, shape index: {}]
  %s9 = inlined_call_operand.vmem [shape: f32[16,8], index: 9, kind: output, shape index: {}]
  %s10 = sld [smem:[#allocation0]]
  $region54: #{tpu_custom_call.1} parent=0
    _
  %s12 = ssub.s32 1, %s10
  %s13 = scalar_select 0, %s12, %s10
  $region1: #{tpu_custom_call.1} parent=0
    #allocation2 [shape = 'u8[4096]{0}', space=vmem, size = 0x1000, scoped, tag = 'input window, operand 1, single buffered']
    #allocation3 [shape = 's32[1]{0}', space=sflag, size = 0x4, scoped, tag = 'scoped memory for tpu_custom_call.1']
    #allocation4 [shape = 'u8[1024]{0}', space=vmem, size = 0x400, scoped, tag = 'input window, operand 2, single buffered']
    #allocation5 [shape = 's32[1]{0}', space=sflag, size = 0x4, scoped, tag = 'scoped memory for tpu_custom_call.1']
    %14 = vsyncpa [#allocation3], 0
    %15 = vsyncpa [#allocation5], 0
    // Predicated region
    $region2: #{tpu_custom_call.1} parent=1 // pred_check
      _
    $region3: #{tpu_custom_call.1} parent=1 // pred_check_branch
      %17 = sbr.rel (0) target = $region5
    $region4: #{tpu_custom_call.1} parent=1 // pred_region
      _
    $region5: #{tpu_custom_call.1} parent=1 // pred_fallthru
      _
    // Predicated region
    $region6: #{tpu_custom_call.1} parent=1 // pred_check
      _
    $region7: #{tpu_custom_call.1} parent=1 // pred_check_branch
      %19 = sbr.rel (0) target = $region9
    $region8: #{tpu_custom_call.1} parent=1 // pred_region
      %s21 = ssub.s32 128, 128
      %22 = vsyncadd [#allocation3], %s21
      %s23 = sshll.u32 [#allocation2], 4
      %s24 = int_to_ptr.vmem [resolvable:$true] %s23
      %29 = dma.hbm_to_vmem [thread:$0]  %s1, 128, %s24, [#allocation3], 64, 64, 4
    $region9: #{tpu_custom_call.1} parent=1 // pred_fallthru
      _
    // Predicated region
    $region10: #{tpu_custom_call.1} parent=1 // pred_check
      _
    $region11: #{tpu_custom_call.1} parent=1 // pred_check_branch
      %31 = sbr.rel (0) target = $region13
    $region12: #{tpu_custom_call.1} parent=1 // pred_region
      %s33 = ssub.s32 32, 32
      %34 = vsyncadd [#allocation5], %s33
      %s36 = sshll.u32 [#allocation4], 4
      %s37 = int_to_ptr.vmem [resolvable:$true] %s36
      %39 = dma.hbm_to_vmem [thread:$0]  %s2, 32, %s37, [#allocation5]
    $region13: #{tpu_custom_call.1} parent=1 // pred_fallthru
      _
    // Predicated region
    $region14: #{tpu_custom_call.1} parent=1 // pred_check
      _
    $region15: #{tpu_custom_call.1} parent=1 // pred_check_branch
      %41 = sbr.rel (0) target = $region17
    $region16: #{tpu_custom_call.1} parent=1 // pred_region
      _
    $region17: #{tpu_custom_call.1} parent=1 // pred_fallthru
      _
    // Predicated region
    $region18: #{tpu_custom_call.1} parent=1 // pred_check
      _
    $region19: #{tpu_custom_call.1} parent=1 // pred_check_branch
      %43 = sbr.rel (0) target = $region21
    $region20: #{tpu_custom_call.1} parent=1 // pred_region
      _
    $region21: #{tpu_custom_call.1} parent=1 // pred_fallthru
      _
    // Predicated region
    $region22: #{tpu_custom_call.1} parent=1 // pred_check
      _
    $region23: #{tpu_custom_call.1} parent=1 // pred_check_branch
      %45 = sbr.rel (0) target = $region25
    $region24: #{tpu_custom_call.1} parent=1 // pred_region
      _
    $region25: #{tpu_custom_call.1} parent=1 // pred_fallthru
      _
    // Predicated region
    $region26: #{tpu_custom_call.1} parent=1 // pred_check
      _
    $region27: #{tpu_custom_call.1} parent=1 // pred_check_branch
      %47 = sbr.rel (0) target = $region29
    $region28: #{tpu_custom_call.1} parent=1 // pred_region
      _
    $region29: #{tpu_custom_call.1} parent=1 // pred_fallthru
      _
    // Predicated region
    $region30: #{tpu_custom_call.1} parent=1 // pred_check
      _
    $region31: #{tpu_custom_call.1} parent=1 // pred_check_branch
      %49 = sbr.rel (0) target = $region33
    $region32: #{tpu_custom_call.1} parent=1 // pred_region
      _
    $region33: #{tpu_custom_call.1} parent=1 // pred_fallthru
      _
    // Predicated region
    $region34: #{tpu_custom_call.1} parent=1 // pred_check
      _
    $region35: #{tpu_custom_call.1} parent=1 // pred_check_branch
      %51 = sbr.rel (0) target = $region37
    $region36: #{tpu_custom_call.1} parent=1 // pred_region
      _
    $region37: #{tpu_custom_call.1} parent=1 // pred_fallthru
      _
    // Predicated region
    $region38: #{tpu_custom_call.1} parent=1 // pred_check
      _
    $region39: #{tpu_custom_call.1} parent=1 // pred_check_branch
      %53 = sbr.rel (0) target = $region41
    $region40: #{tpu_custom_call.1} parent=1 // pred_region
      %54 = dma.done [#allocation3], 128
    $region41: #{tpu_custom_call.1} parent=1 // pred_fallthru
      _
    // Predicated region
    $region42: #{tpu_custom_call.1} parent=1 // pred_check
      _
    $region43: #{tpu_custom_call.1} parent=1 // pred_check_branch
      %56 = sbr.rel (0) target = $region45
    $region44: #{tpu_custom_call.1} parent=1 // pred_region
      %57 = dma.done [#allocation5], 32
    $region45: #{tpu_custom_call.1} parent=1 // pred_fallthru
      _
    %v59 = vld [vmem:[%s0] sm:$0xf]
    %v60 = vld [vmem:[%s0 + $0x4] sm:$0xf]
    %v61 = vld [vmem:[#allocation4] sm:$0x3]
    %v62 = vld [vmem:[#allocation2] sm:$0xf]
    %v63 = vld [vmem:[#allocation2 + $0x4] sm:$0xf]
    %v64 = vld [vmem:[%s3] sm:$0xf]
    %v65 = vld [vmem:[%s3 + $0x4] sm:$0xf]
    %v66 = vld [vmem:[%s3 + $0x8] sm:$0xf]
    %v67 = vld [vmem:[%s3 + $0xc] sm:$0xf]
    %v70 = vunpack.c.l.b16 %v62
    %v71 = vunpack.c.l.b16 %v63
    %v72 = vpack.c.b16 %v71, %v70
    %v77 = vunpack.c.l.b16 %v64
    %v78 = vunpack.c.l.b16 %v65
    %v79 = vunpack.c.l.b16 %v66
    %v80 = vunpack.c.l.b16 %v67
    %v81 = vpack.c.b16 %v78, %v77
    %v82 = vpack.c.b16 %v80, %v79
    %vm85 = vcmask 261120
    %v87 = vsel %vm85, %v72, 0
    %89 = vmatprep.subr.bf16.mxu0 0
    %90 = vmatpush1.bf16.msra.mxu0 0
    %91 = vmatprep.subr.bf16.mxu0 0
    %92 = vmatpush1.bf16.msra.mxu0 0
    %93 = vmatprep.subr.bf16.mxu0 0
    %94 = vmatpush1.bf16.msra.mxu0 0
    %95 = vmatprep.subr.bf16.mxu0 0
    %96 = vmatpush1.bf16.msra.mxu0 0
    %97 = vmatprep.subr.bf16.mxu0 0
    %98 = vmatpush1.bf16.msra.mxu0 0
    %99 = vmatprep.subr.bf16.mxu0 0
    %100 = vmatpush1.bf16.msra.mxu0 0
    %101 = vmatprep.subr.bf16.mxu0 0
    %102 = vmatpush1.bf16.msra.mxu0 %v82
    %103 = vmatprep.subr.bf16.mxu0 0
    %104 = vmatpush1.bf16.msra.mxu0 %v81
    %105 = vmatprep.subr.bf16.mxu0 0
    %106 = vmatpush2.bf16.msra.mxu0 0
    %107 = vmatprep.subr.bf16.mxu0 0
    %108 = vmatpush2.bf16.msra.mxu0 0
    %109 = vmatprep.subr.bf16.mxu0 0
    %110 = vmatpush2.bf16.msra.mxu0 0
    %111 = vmatprep.subr.bf16.mxu0 0
    %112 = vmatpush2.bf16.msra.mxu0 0
    %113 = vmatprep.subr.bf16.mxu0 0
    %114 = vmatpush2.bf16.msra.mxu0 0
    %115 = vmatprep.subr.bf16.mxu0 0
    %116 = vmatpush2.bf16.msra.mxu0 0
    %117 = vmatprep.subr.bf16.mxu0 0
    %118 = vmatpush2.bf16.msra.mxu0 0
    %119 = vmatprep.subr.bf16.mxu0 0
    %120 = vmatpush2.bf16.msra.mxu0 0
    %121 = vmatprep.mubr.bf16.mxu0 0
    %122 = vmatmul.mubr.bf16.gmra.mxu0 %v87
    %v123 = vpop.f32.mrf.mxu0
    %v124 = vadd.f32 0.0, %v123
    %v125 = vpop.f32.mrf.mxu0
    %v126 = vpop.f32.mrf.mxu0
    %v127 = vadd.f32 0.0, %v126
    %v128 = vpop.f32.mrf.mxu0
    %129 = vdwg.mxu0
    %v132 = vunpack.c.l.b16 %v59
    %v133 = vunpack.c.l.b16 %v60
    %v134 = vpack.c.b16 %v133, %v132
    %vm135 = vcmask 31744
    %v137 = vsel %vm135, %v134, 0
    %vm139 = vcmask 1041408
    %v141 = vsel %vm139, %v61, 0
    %143 = vmatprep.subr.bf16.mxu0 0
    %144 = vmatpush1.bf16.msra.mxu0 0
    %145 = vmatprep.subr.bf16.mxu0 0
    %146 = vmatpush1.bf16.msra.mxu0 0
    %147 = vmatprep.subr.bf16.mxu0 0
    %148 = vmatpush1.bf16.msra.mxu0 0
    %149 = vmatprep.subr.bf16.mxu0 0
    %150 = vmatpush1.bf16.msra.mxu0 0
    %151 = vmatprep.subr.bf16.mxu0 0
    %152 = vmatpush1.bf16.msra.mxu0 0
    %153 = vmatprep.subr.bf16.mxu0 0
    %154 = vmatpush1.bf16.msra.mxu0 0
    %155 = vmatprep.subr.bf16.mxu0 0
    %156 = vmatpush1.bf16.msra.mxu0 0
    %157 = vmatprep.subr.bf16.mxu0 0
    %158 = vmatpush1.bf16.msra.mxu0 %v141
    %159 = vmatprep.subr.bf16.mxu0 0
    %160 = vmatpush2.bf16.msra.mxu0 0
    %161 = vmatprep.subr.bf16.mxu0 0
    %162 = vmatpush2.bf16.msra.mxu0 0
    %163 = vmatprep.subr.bf16.mxu0 0
    %164 = vmatpush2.bf16.msra.mxu0 0
    %165 = vmatprep.subr.bf16.mxu0 0
    %166 = vmatpush2.bf16.msra.mxu0 0
    %167 = vmatprep.subr.bf16.mxu0 0
    %168 = vmatpush2.bf16.msra.mxu0 0
    %169 = vmatprep.subr.bf16.mxu0 0
    %170 = vmatpush2.bf16.msra.mxu0 0
    %171 = vmatprep.subr.bf16.mxu0 0
    %172 = vmatpush2.bf16.msra.mxu0 0
    %173 = vmatprep.subr.bf16.mxu0 0
    %174 = vmatpush2.bf16.msra.mxu0 0
    %175 = vmatprep.mubr.bf16.mxu0 0
    %176 = vmatmul.mubr.bf16.gmra.mxu0 %v137
    %v177 = vpop.f32.mrf.mxu0
    %v178 = vadd.f32 %v124, %v177
    %v179 = vpop.f32.mrf.mxu0
    %v180 = vpop.f32.mrf.mxu0
    %v181 = vadd.f32 %v127, %v180
    %v182 = vpop.f32.mrf.mxu0
    %183 = vdwg.mxu0
    %v184 = vld [vmem:[%s4] sm:$0x1]
    %v186 = vlaneseq
    %v187 = vshrl.u32 %v186, 7
    %v188 = vsub.s32 0, %v187
    %v189 = vrot.slane %v184, %v188
    %v191 = vadd.f32 %v178, %v189
    %v192 = vadd.f32 %v181, %v189
    %v193 = vmax.f32 %v191, 0.0
    %v194 = vmax.f32 %v192, 0.0
    %v195 = vpack.c.bf16 %v194, %v193
    %v196 = vld [vmem:[%s5] sm:$0xf]
    %v197 = vld [vmem:[%s5 + $0x4] sm:$0xf]
    %v198 = vld [vmem:[%s5 + $0x8] sm:$0xf]
    %v199 = vld [vmem:[%s5 + $0xc] sm:$0xf]
    %v200 = vld [vmem:[%s6] sm:$0x1]
    %v202 = vlaneseq
    %v203 = vshrl.u32 %v202, 7
    %v204 = vsub.s32 0, %v203
    %v205 = vrot.slane %v200, %v204
    %v211 = vunpack.c.l.b16 %v196
    %v212 = vunpack.c.l.b16 %v197
    %v213 = vunpack.c.l.b16 %v198
    %v214 = vunpack.c.l.b16 %v199
    %v215 = vpack.c.b16 %v212, %v211
    %v216 = vpack.c.b16 %v214, %v213
    %v220 = vsel %vm85, %v195, 0
    %222 = vmatprep.subr.bf16.mxu0 0
    %223 = vmatpush1.bf16.msra.mxu0 0
    %224 = vmatprep.subr.bf16.mxu0 0
    %225 = vmatpush1.bf16.msra.mxu0 0
    %226 = vmatprep.subr.bf16.mxu0 0
    %227 = vmatpush1.bf16.msra.mxu0 0
    %228 = vmatprep.subr.bf16.mxu0 0
    %229 = vmatpush1.bf16.msra.mxu0 0
    %230 = vmatprep.subr.bf16.mxu0 0
    %231 = vmatpush1.bf16.msra.mxu0 0
    %232 = vmatprep.subr.bf16.mxu0 0
    %233 = vmatpush1.bf16.msra.mxu0 0
    %234 = vmatprep.subr.bf16.mxu0 0
    %235 = vmatpush1.bf16.msra.mxu0 %v216
    %236 = vmatprep.subr.bf16.mxu0 0
    %237 = vmatpush1.bf16.msra.mxu0 %v215
    %238 = vmatprep.subr.bf16.mxu0 0
    %239 = vmatpush2.bf16.msra.mxu0 0
    %240 = vmatprep.subr.bf16.mxu0 0
    %241 = vmatpush2.bf16.msra.mxu0 0
    %242 = vmatprep.subr.bf16.mxu0 0
    %243 = vmatpush2.bf16.msra.mxu0 0
    %244 = vmatprep.subr.bf16.mxu0 0
    %245 = vmatpush2.bf16.msra.mxu0 0
    %246 = vmatprep.subr.bf16.mxu0 0
    %247 = vmatpush2.bf16.msra.mxu0 0
    %248 = vmatprep.subr.bf16.mxu0 0
    %249 = vmatpush2.bf16.msra.mxu0 0
    %250 = vmatprep.subr.bf16.mxu0 0
    %251 = vmatpush2.bf16.msra.mxu0 0
    %252 = vmatprep.subr.bf16.mxu0 0
    %253 = vmatpush2.bf16.msra.mxu0 0
    %254 = vmatprep.mubr.bf16.mxu0 0
    %255 = vmatmul.mubr.bf16.gmra.mxu0 %v220
    %v256 = vpop.f32.mrf.mxu0
    %v257 = vadd.f32 %v205, %v256
    %v258 = vpop.f32.mrf.mxu0
    %v259 = vpop.f32.mrf.mxu0
    %v260 = vadd.f32 %v205, %v259
    %v261 = vpop.f32.mrf.mxu0
    %262 = vdwg.mxu0
    %v263 = vmax.f32 %v257, 0.0
    %v264 = vmax.f32 %v260, 0.0
    %v265 = vpack.c.bf16 %v264, %v263
    %v266 = vld [vmem:[%s7] sm:$0xf]
    %v267 = vld [vmem:[%s7 + $0x4] sm:$0xf]
    %v268 = vld [vmem:[%s7 + $0x8] sm:$0xf]
    %v269 = vld [vmem:[%s7 + $0xc] sm:$0xf]
    %v270 = vld [vmem:[%s8] sm:$0x1]
    %v272 = vlaneseq
    %v273 = vshrl.u32 %v272, 7
    %v274 = vsub.s32 0, %v273
    %v275 = vrot.slane %v270, %v274
    %v281 = vunpack.c.l.b16 %v266
    %v282 = vunpack.c.l.b16 %v267
    %v283 = vunpack.c.l.b16 %v268
    %v284 = vunpack.c.l.b16 %v269
    %v285 = vpack.c.b16 %v282, %v281
    %v286 = vpack.c.b16 %v284, %v283
    %v290 = vsel %vm85, %v265, 0
    %292 = vmatprep.subr.bf16.mxu0 0
    %293 = vmatpush1.bf16.msra.mxu0 0
    %294 = vmatprep.subr.bf16.mxu0 0
    %295 = vmatpush1.bf16.msra.mxu0 0
    %296 = vmatprep.subr.bf16.mxu0 0
    %297 = vmatpush1.bf16.msra.mxu0 0
    %298 = vmatprep.subr.bf16.mxu0 0
    %299 = vmatpush1.bf16.msra.mxu0 0
    %300 = vmatprep.subr.bf16.mxu0 0
    %301 = vmatpush1.bf16.msra.mxu0 0
    %302 = vmatprep.subr.bf16.mxu0 0
    %303 = vmatpush1.bf16.msra.mxu0 0
    %304 = vmatprep.subr.bf16.mxu0 0
    %305 = vmatpush1.bf16.msra.mxu0 %v286
    %306 = vmatprep.subr.bf16.mxu0 0
    %307 = vmatpush1.bf16.msra.mxu0 %v285
    %308 = vmatprep.subr.bf16.mxu0 0
    %309 = vmatpush2.bf16.msra.mxu0 0
    %310 = vmatprep.subr.bf16.mxu0 0
    %311 = vmatpush2.bf16.msra.mxu0 0
    %312 = vmatprep.subr.bf16.mxu0 0
    %313 = vmatpush2.bf16.msra.mxu0 0
    %314 = vmatprep.subr.bf16.mxu0 0
    %315 = vmatpush2.bf16.msra.mxu0 0
    %316 = vmatprep.subr.bf16.mxu0 0
    %317 = vmatpush2.bf16.msra.mxu0 0
    %318 = vmatprep.subr.bf16.mxu0 0
    %319 = vmatpush2.bf16.msra.mxu0 0
    %320 = vmatprep.subr.bf16.mxu0 0
    %321 = vmatpush2.bf16.msra.mxu0 0
    %322 = vmatprep.subr.bf16.mxu0 0
    %323 = vmatpush2.bf16.msra.mxu0 0
    %324 = vmatprep.mubr.bf16.mxu0 0
    %325 = vmatmul.mubr.bf16.gmra.mxu0 %v290
    %v326 = vpop.f32.mrf.mxu0
    %v327 = vadd.f32 %v275, %v326
    %v328 = vpop.f32.mrf.mxu0
    %v329 = vpop.f32.mrf.mxu0
    %v330 = vadd.f32 %v275, %v329
    %v331 = vpop.f32.mrf.mxu0
    %332 = vdwg.mxu0
    %v333 = vmax.f32 %v327, 0.0
    %v334 = vmax.f32 %v330, 0.0
    %v335 = vand.u32 2147483647, %v327
    %v336 = vand.u32 2147483647, %v330
    %v337 = vsub.f32 0.0, %v335
    %v338 = vsub.f32 0.0, %v336
    %v339 = vmul.f32 %v337, 1.442695
    %v340 = vpow.pop %v339
    %v341 = vmul.f32 %v338, 1.442695
    %v342 = vpow.pop %v341
    %v343 = vadd.f32 %v340, 1.0
    %v344 = vlog2.pop %v343
    %v345 = vmul.f32 %v344, 0.6931472
    %v346 = vmul.f32 -0.5, %v340
    %v347 = vadd.f32 %v346, 1.0
    %v348 = vmul.f32 %v347, %v340
    %v349 = vand.u32 2147483647, %v340
    %vm350 = vcmp.lt.f32.partialorder %v349, 0.0004427343
    %v351 = vsel %vm350, %v348, %v345
    %v352 = vadd.f32 %v342, 1.0
    %v353 = vlog2.pop %v352
    %v354 = vmul.f32 %v353, 0.6931472
    %v355 = vmul.f32 -0.5, %v342
    %v356 = vadd.f32 %v355, 1.0
    %v357 = vmul.f32 %v356, %v342
    %v358 = vand.u32 2147483647, %v342
    %vm359 = vcmp.lt.f32.partialorder %v358, 0.0004427343
    %v360 = vsel %vm359, %v357, %v354
    %v361 = vadd.f32 %v333, %v351
    %v362 = vadd.f32 %v334, %v360
    %v363 = vlaneseq
    %v364 = vand.u32 %v363, 127
    %vm365 = vcmp.lt.s32.totalorder %v364, 4
    %v366 = vsel %vm365, %v327, %v361
    %v367 = vsel %vm365, %v330, %v362
    %vm368 = vcmask 64512
    %369 = vst.msk [vmem:[%s9] sm:$0xff] %vm368, %v366
    %370 = vst.msk [vmem:[%s9 + $0x8] sm:$0xff] %vm368, %v367
    // Predicated region
    $region46: #{tpu_custom_call.1} parent=1 // pred_check
      _
    $region47: #{tpu_custom_call.1} parent=1 // pred_check_branch
      %372 = sbr.rel (0) target = $region49
    $region48: #{tpu_custom_call.1} parent=1 // pred_region
      _
    $region49: #{tpu_custom_call.1} parent=1 // pred_fallthru
      _
    // Predicated region
    $region50: #{tpu_custom_call.1} parent=1 // pred_check
      _
    $region51: #{tpu_custom_call.1} parent=1 // pred_check_branch
      %374 = sbr.rel (0) target = $region53
    $region52: #{tpu_custom_call.1} parent=1 // pred_region
      _
    $region53: #{tpu_custom_call.1} parent=1 // pred_fallthru
      _
    %375 = vsyncpa [#allocation3], 1
    %376 = vsyncpa [#allocation5], 1

</llo_original>
